<compile_context>
chip_gen: v7x
topology: tpu7x:2x2x1
jax: 0.10.0
libtpu: 0.0.40
codegen_flags: <defaults>
</compile_context>

<pallas_src>
import jax
import jax.numpy as jnp
from jax.experimental import pallas as pl
from jax.experimental.pallas import tpu as pltpu


def _zerovel_kernel(p_ref, o_ref):
    # p_ref: (bt, dk)             -- last-time-step rows, lane-contiguous
    # o_ref: (bt, seq_len * dk)   -- lane-dense output rows
    dk = p_ref.shape[1]
    seq_len = o_ref.shape[1] // dk
    # Single dense full-block store.  Mosaic builds the seq_len lane-copies
    # once in vregs and writes the tile with full-width unmasked stores,
    # instead of seq_len masked partial stores + lane rotations.
    o_ref[...] = jnp.tile(p_ref[...], (1, seq_len))


def _sublane_packing(dtype):
    # Rows per vreg sublane group: 8 for 32-bit, 16 for bf16, 32 for int8/fp8.
    return max(8, 32 // jnp.dtype(dtype).itemsize)


def _pick_batch_block(B, row_bytes, dtype,
                      target_block_bytes=2 << 20,   # ~2 MiB output block
                      vmem_budget_bytes=8 << 20):   # cap for 2x double-buffer
    sub = _sublane_packing(dtype)
    if B <= sub:
        # Full-extent batch block (equals the array dim, so the (8,128)
        # BlockSpec rule is satisfied) -> single grid step.
        return B
    bt = max(sub, target_block_bytes // row_bytes)
    # Keep double-buffered output blocks comfortably inside the default
    # scoped-VMEM limit on all generations (v7x is the tightest at 32 MiB).
    bt = min(bt, max(sub, vmem_budget_bytes // (2 * row_bytes)))
    # Sublane-aligned, and never larger than the (sublane-aligned) batch.
    bt = (bt // sub) * sub
    bt = min(bt, (B // sub) * sub)
    return max(bt, sub)


def zerovel_forward(x, seq_len=25, block_b=None):
    """x: (B, D, L, K) -> (B, seq_len, D, K), broadcasting the last time step."""
    B, D, L, K = x.shape
    dk = D * K
    itemsize = jnp.dtype(x.dtype).itemsize
    row_bytes = seq_len * dk * itemsize

    # TODO(synk): like the PyTorch module, this assumes B >= 4 (and no
    # accidental size-1 dims eaten by .squeeze()); smaller B makes the torch
    # `repeat` ill-formed and is not reproduced here.

    # Last time step, flattened so D*K sits on the lane axis (tiny XLA op;
    # the kernel never fetches the other L-1 time steps from HBM).
    p = x[:, :, L - 1, :].reshape(B, dk)

    bt = block_b if block_b is not None else _pick_batch_block(B, row_bytes, x.dtype)
    grid = (pl.cdiv(B, bt),)

    cost = pl.CostEstimate(
        flops=0,
        transcendentals=0,
        bytes_accessed=B * dk * itemsize + B * seq_len * dk * itemsize,
    )

    out_flat = pl.pallas_call(
        _zerovel_kernel,
        out_shape=jax.ShapeDtypeStruct((B, seq_len * dk), x.dtype),
        grid_spec=pl.GridSpec(
            grid=grid,
            in_specs=[
                pl.BlockSpec((bt, dk), lambda b: (b, 0),
                             memory_space=pltpu.MemorySpace.VMEM),
            ],
            out_specs=pl.BlockSpec((bt, seq_len * dk), lambda b: (b, 0),
                                   memory_space=pltpu.MemorySpace.VMEM),
        ),
        compiler_params=pltpu.CompilerParams(
            dimension_semantics=("parallel",),
        ),
        cost_estimate=cost,
    )(p)

    # Free row-major reshape back to the module's output layout.
    return out_flat.reshape(B, seq_len, D, K)


def _reference(x, seq_len):
    B, D, L, K = x.shape
    return jnp.transpose(
        jnp.broadcast_to(x[:, :, -1:, :], (B, D, seq_len, K)), (0, 2, 1, 3)
    )


if __name__ == "__main__":
    key = jax.random.PRNGKey(0)

    # Primary case: B multiple of the sublane packing -> single dense block.
    B, D, L, K = 8, 4, 16, 8
    seq_len = 8
    x = jax.random.normal(key, (B, D, L, K), dtype=jnp.float32)
    out = jax.block_until_ready(zerovel_forward(x, seq_len=seq_len))
    ref = _reference(x, seq_len)
    assert out.shape == (B, seq_len, D, K), out.shape
    assert out.dtype == x.dtype
    assert jnp.array_equal(out, ref), "mismatch vs reference (case 1)"

    # Ragged case: B not a multiple of 8 exercises the cdiv grid / padded
    # last block (previous divisor search would have degraded to bt=1).
    B2, seq_len2 = 11, 5
    x2 = jax.random.normal(jax.random.PRNGKey(0), (B2, D, L, K),
                           dtype=jnp.float32)
    out2 = jax.block_until_ready(zerovel_forward(x2, seq_len=seq_len2))
    ref2 = _reference(x2, seq_len2)
    assert out2.shape == (B2, seq_len2, D, K), out2.shape
    assert jnp.array_equal(out2, ref2), "mismatch vs reference (case 2)"

    print("KERNEL_OK")
</pallas_src>

<mosaic_0001>
module attributes {stable_mosaic.version = 11 : i64} {
  func.func @_zerovel_kernel(%arg0: i32, %arg1: memref<8x32xf32, #tpu.memory_space<vmem>>, %arg2: memref<8x256xf32, #tpu.memory_space<vmem>>) attributes {dimension_semantics = [#tpu.dimension_semantics<parallel>], iteration_bounds = array<i64: 1>, scalar_prefetch = 0 : i64, scratch_operands = 0 : i64, tpu.core_type = #tpu.core_type<tc>, window_params = [{transform_indices = @transform_0, window_bounds = array<i64: 8, 32>}, {transform_indices = @transform_1, window_bounds = array<i64: 8, 256>}]} {
    %c0 = arith.constant 0 : index
    %c0_0 = arith.constant 0 : index
    %0 = vector.load %arg1[%c0, %c0_0] : memref<8x32xf32, #tpu.memory_space<vmem>>, vector<8x32xf32>
    %1 = tpu.concatenate %0, %0, %0, %0, %0, %0, %0, %0 in 1 : vector<8x32xf32>, vector<8x32xf32>, vector<8x32xf32>, vector<8x32xf32>, vector<8x32xf32>, vector<8x32xf32>, vector<8x32xf32>, vector<8x32xf32> -> vector<8x256xf32>
    %c0_1 = arith.constant 0 : index
    %c0_2 = arith.constant 0 : index
    %2 = vector.load %arg2[%c0_1, %c0_2] : memref<8x256xf32, #tpu.memory_space<vmem>>, vector<8x256xf32>
    tpu.vector_store %arg2[%c0_1, %c0_2], %1 {strides = array<i32>} : memref<8x256xf32, #tpu.memory_space<vmem>>, vector<8x256xf32>,
    return
  }
  func.func @transform_0(%arg0: i32) -> (i32, i32) {
    %c0_i32 = arith.constant 0 : i32
    %c0_i32_0 = arith.constant 0 : i32
    return %arg0, %c0_i32 : i32, i32
  }
  func.func @transform_1(%arg0: i32) -> (i32, i32) {
    %c0_i32 = arith.constant 0 : i32
    %c0_i32_0 = arith.constant 0 : i32
    return %arg0, %c0_i32 : i32, i32
  }
}

</mosaic_0001>

<llo_original>
// kernel: tpu_custom_call.1
$region0: #{tpu_custom_call.1}
  #allocation0 [shape = 'u32[]', space=smem, size = 0x4, offset = 0x4, fixed_abs, tag = 'smem constant byte address 0x4 - core index']
  #allocation1 [shape = 'u32[144,128]{1,0:T(1,128)}', space=vmem, size = 0x12000, scoped, tag = 'internal scratch']
  %s0 = inlined_call_operand.hbm [shape: f32[8,32], index: 0, kind: input, shape index: {}]
  %s1 = inlined_call_operand.hbm [shape: f32[8,256], index: 1, kind: output, shape index: {}]
  %s2 = sld [smem:[#allocation0]]
  $region18: #{tpu_custom_call.1} parent=0
    _
  %s4 = ssub.s32 1, %s2
  %s5 = scalar_select 0, %s4, %s2
  $region1: #{tpu_custom_call.1} parent=0
    #allocation2 [shape = 'u8[4096]{0}', space=vmem, size = 0x1000, scoped, tag = 'input window, operand 0, single buffered']
    #allocation3 [shape = 's32[1]{0}', space=sflag, size = 0x4, scoped, tag = 'scoped memory for tpu_custom_call.1']
    #allocation4 [shape = 's32[1]{0}', space=sflag, size = 0x4, scoped, tag = 'scoped memory for tpu_custom_call.1']
    #allocation5 [shape = 'u8[8192]{0}', space=vmem, size = 0x2000, scoped, tag = 'output window, operand 0, single buffered']
    %6 = vsyncpa [#allocation3], 0
    %7 = vsyncpa [#allocation4], 0
    // Predicated region
    $region2: #{tpu_custom_call.1} parent=1 // pred_check
      _
    $region3: #{tpu_custom_call.1} parent=1 // pred_check_branch
      %9 = sbr.rel (0) target = $region5
    $region4: #{tpu_custom_call.1} parent=1 // pred_region
      %s11 = ssub.s32 128, 128
      %12 = vsyncadd [#allocation3], %s11
      %s14 = sshll.u32 [#allocation2], 4
      %s15 = int_to_ptr.vmem [resolvable:$true] %s14
      %17 = dma.hbm_to_vmem [thread:$0]  %s0, 128, %s15, [#allocation3]
    $region5: #{tpu_custom_call.1} parent=1 // pred_fallthru
      _
    // Predicated region
    $region6: #{tpu_custom_call.1} parent=1 // pred_check
      _
    $region7: #{tpu_custom_call.1} parent=1 // pred_check_branch
      %19 = sbr.rel (0) target = $region9
    $region8: #{tpu_custom_call.1} parent=1 // pred_region
      %20 = dma.done [#allocation3], 128
    $region9: #{tpu_custom_call.1} parent=1 // pred_fallthru
      _
    %v21 = vld [vmem:[#allocation2] sm:$0xff]
    %23 = vrot.lane.b32.xlu0 %v21, 32
    %v24 = vpop.permute.xlu0 %23
    %26 = vrot.lane.b32.xlu0 %v21, 64
    %v27 = vpop.permute.xlu0 %26
    %29 = vrot.lane.b32.xlu0 %v21, 96
    %v30 = vpop.permute.xlu0 %29
    %vm32 = vcmask 261120
    %v33 = vsel %vm32, %v21, %v24
    %vm34 = vcmask 523264
    %v35 = vsel %vm34, %v33, %v27
    %vm36 = vcmask 785408
    %v37 = vsel %vm36, %v35, %v30
    %38 = vst [vmem:[#allocation5] sm:$0xff] %v37
    %39 = vst [vmem:[#allocation5 + $0x8] sm:$0xff] %v37
    // Predicated region
    $region10: #{tpu_custom_call.1} parent=1 // pred_check
      _
    $region11: #{tpu_custom_call.1} parent=1 // pred_check_branch
      %41 = sbr.rel (0) target = $region13
    $region12: #{tpu_custom_call.1} parent=1 // pred_region
      %s43 = ssub.s32 256, 256
      %44 = vsyncadd [#allocation4], %s43
      %s46 = sshll.u32 [#allocation5], 4
      %s47 = int_to_ptr.vmem [resolvable:$true] %s46
      %49 = dma.vmem_to_hbm [thread:$0]  %s47, 256, %s1, [#allocation4]
    $region13: #{tpu_custom_call.1} parent=1 // pred_fallthru
      _
    // Predicated region
    $region14: #{tpu_custom_call.1} parent=1 // pred_check
      _
    $region15: #{tpu_custom_call.1} parent=1 // pred_check_branch
      %51 = sbr.rel (0) target = $region17
    $region16: #{tpu_custom_call.1} parent=1 // pred_region
      %52 = dma.done [#allocation4], 256
    $region17: #{tpu_custom_call.1} parent=1 // pred_fallthru
      _
    %53 = vsyncpa [#allocation3], 1
    %54 = vsyncpa [#allocation4], 1

</llo_original>
